<compile_context>
chip_gen: v7x
topology: tpu7x:2x2x1
jax: 0.10.0
libtpu: 0.0.40
codegen_flags: <defaults>
</compile_context>

<pallas_src>
import functools

import jax
import jax.numpy as jnp
from jax.experimental import pallas as pl
from jax.experimental.pallas import tpu as pltpu

LANES = 128      # vreg lane width
ACC_ROWS = 8     # vreg sublane count -> accumulator shape (8, 128)


def _sumsq_kernel(x_ref, y_ref, o_ref, *, rows, tile_rows, tiles_per_split,
                  needs_mask):
    """Accumulate sum((x - y)^2) into a per-split (1, 8, 128) f32 partial sum."""
    c = pl.program_id(0)          # split axis (v7x: one split per TensorCore)
    i = pl.program_id(1)          # sequential reduction over row-tiles

    @pl.when(i == 0)
    def _init():
        o_ref[...] = jnp.zeros_like(o_ref)

    d = x_ref[...].astype(jnp.float32) - y_ref[...].astype(jnp.float32)

    def _accumulate(vals):
        sq = vals * vals
        # Leading-axis reduce = pure VPU vreg adds (no cross-lane XLU work).
        part = jnp.sum(sq.reshape(tile_rows // ACC_ROWS, ACC_ROWS, LANES),
                       axis=0)
        o_ref[...] += part.reshape(1, ACC_ROWS, LANES)

    if needs_mask:
        # True (unclamped) tile index; rows_left <= 0 for fully-clamped tiles.
        t = c * tiles_per_split + i
        rows_left = rows - t * tile_rows      # scalar: valid rows in this tile

        @pl.when(rows_left >= tile_rows)      # full tile: no mask cost at all
        def _full():
            _accumulate(d)

        @pl.when(rows_left < tile_rows)       # boundary / clamped tile only
        def _partial():
            local = jax.lax.broadcasted_iota(jnp.int32, (tile_rows, LANES), 0)
            _accumulate(jnp.where(local < rows_left, d, 0.0))
    else:
        _accumulate(d)


def _round_up(v, m):
    return ((v + m - 1) // m) * m


def _sublane_min_rows(*dtypes):
    # Packed sublane tile: 8 rows for 32-bit, 16 for 16-bit, 32 for 8-bit types.
    packing = max(max(1, 4 // jnp.dtype(d).itemsize) for d in dtypes)
    return ACC_ROWS * packing


def _default_tile_rows(*dtypes, target_bytes=4 * 1024 * 1024):
    # ~4 MiB per input buffer regardless of dtype (8192 f32 / 16384 bf16 rows).
    itemsize = max(jnp.dtype(d).itemsize for d in dtypes)
    return max(ACC_ROWS, target_bytes // (LANES * itemsize))


def _tensorcores_per_chip():
    try:
        kind = jax.devices()[0].device_kind.lower()
    except Exception:
        return 1
    # v7x has 2 TensorCores per chip; v5e / v6e have 1.
    return 2 if ("v7" in kind or "7x" in kind) else 1


def rmse_loss(x, y, *, tile_rows=None, num_splits=None):
    """sqrt(mean((x - y)**2)) — matches torch.sqrt(nn.MSELoss()(x, y))."""
    assert x.shape == y.shape, "MSELoss with default args requires equal shapes"
    n = int(x.size)
    if n == 0:
        return jnp.float32(jnp.nan)

    xf = jnp.ravel(x)            # native dtype; kernel casts to f32 per tile
    yf = jnp.ravel(y)

    rows = n // LANES            # full 128-wide lane rows
    rem = n - rows * LANES       # flat tail (< 128 elems), summed in plain JAX

    mr = _sublane_min_rows(x.dtype, y.dtype)

    if rows < mr:
        # Tiny input (< mr*128 elements): plain JAX beats a kernel launch.
        d = xf.astype(jnp.float32) - yf.astype(jnp.float32)
        return jnp.sqrt(jnp.sum(d * d) / n)

    total_ss = jnp.float32(0.0)
    if rem:
        td = (xf[rows * LANES:].astype(jnp.float32)
              - yf[rows * LANES:].astype(jnp.float32))
        total_ss = total_ss + jnp.sum(td * td)

    # Aligned n: this reshape is a free bitcast.  Ragged n: one prefix-slice
    # copy (see TODO at top of file).
    x2 = xf[: rows * LANES].reshape(rows, LANES)
    y2 = yf[: rows * LANES].reshape(rows, LANES)

    multi_tc = _tensorcores_per_chip() > 1
    if num_splits is None:
        num_splits = 2 if multi_tc else 1
    num_splits = max(1, int(num_splits))

    cap = int(tile_rows) if tile_rows is not None else _default_tile_rows(
        x.dtype, y.dtype)
    cap = _round_up(max(cap, mr), mr)

    # Tile height: multiple of the packed sublane tile, no larger than each
    # split's share of the rows, and never larger than the array's row extent
    # (so the only irregular block is the standard partial last tile).
    tr = max(mr, min(cap, _round_up(pl.cdiv(rows, num_splits), mr)))
    tr = min(tr, (rows // mr) * mr)

    n_blocks = pl.cdiv(rows, tr)
    num_splits = min(num_splits, n_blocks)   # no fully-wasted clamped splits
    tiles_per_split = pl.cdiv(n_blocks, num_splits)
    needs_mask = (rows % tr != 0) or (num_splits * tiles_per_split != n_blocks)

    def in_map(c, i):
        # Clamp so every grid step addresses a valid block; the kernel masks
        # out rows that do not really belong to this step.
        return (jnp.minimum(c * tiles_per_split + i, n_blocks - 1), 0)

    kernel = functools.partial(
        _sumsq_kernel, rows=rows, tile_rows=tr,
        tiles_per_split=tiles_per_split, needs_mask=needs_mask)

    in_itemsize = max(jnp.dtype(x.dtype).itemsize, jnp.dtype(y.dtype).itemsize)
    working_set = 2 * 2 * tr * LANES * in_itemsize   # 2 inputs, double-buffered
    vmem_limit = int(max(32 * 1024 * 1024, working_set + (4 << 20)))

    if num_splits > 1 and multi_tc:
        split_sem = pltpu.CORE_PARALLEL      # real dual-TC sharding on v7x
    elif num_splits > 1:
        split_sem = pltpu.PARALLEL
    else:
        split_sem = pltpu.ARBITRARY

    bytes_accessed = (rows * LANES
                      * (jnp.dtype(x.dtype).itemsize + jnp.dtype(y.dtype).itemsize)
                      + num_splits * ACC_ROWS * LANES * 4)
    cost = pl.CostEstimate(flops=3 * rows * LANES, transcendentals=0,
                           bytes_accessed=int(bytes_accessed))

    partials = pl.pallas_call(
        kernel,
        out_shape=jax.ShapeDtypeStruct((num_splits, ACC_ROWS, LANES),
                                       jnp.float32),
        grid_spec=pltpu.PrefetchScalarGridSpec(
            num_scalar_prefetch=0,
            grid=(num_splits, tiles_per_split),
            in_specs=[pl.BlockSpec((tr, LANES), in_map),
                      pl.BlockSpec((tr, LANES), in_map)],
            out_specs=pl.BlockSpec((1, ACC_ROWS, LANES),
                                   lambda c, i: (c, 0, 0)),
        ),
        compiler_params=pltpu.CompilerParams(
            dimension_semantics=(split_sem, pltpu.ARBITRARY),
            vmem_limit_bytes=vmem_limit),
        cost_estimate=cost,
    )(x2, y2)

    total_ss = total_ss + jnp.sum(partials)
    return jnp.sqrt(total_ss / n)


if __name__ == "__main__":
    key = jax.random.PRNGKey(0)
    kx, ky = jax.random.split(key)

    def _ref(a, b):
        af = a.astype(jnp.float32)
        bf = b.astype(jnp.float32)
        return jnp.sqrt(jnp.mean((af - bf) ** 2))

    # 1) Small NCHW prediction/target pair, like the PyTorch module would see.
    x = jax.random.normal(kx, (2, 4, 16, 16), dtype=jnp.float32)
    y = jax.random.normal(ky, (2, 4, 16, 16), dtype=jnp.float32)
    loss = rmse_loss(x, y)
    jax.block_until_ready(loss)
    assert jnp.allclose(loss, _ref(x, y), rtol=1e-5, atol=1e-6), (loss, _ref(x, y))

    # 2) Ragged element count (not a multiple of 128): gated in-kernel row mask
    #    on the boundary tile plus a tiny JAX-side tail sum.
    xr = jax.random.normal(kx, (3, 5, 7, 11), dtype=jnp.float32)
    yr = jax.random.normal(ky, (3, 5, 7, 11), dtype=jnp.float32)
    loss_r = rmse_loss(xr, yr)
    jax.block_until_ready(loss_r)
    assert jnp.allclose(loss_r, _ref(xr, yr), rtol=1e-5, atol=1e-6), (loss_r, _ref(xr, yr))

    # 3) Force a multi-step grid to exercise the accumulate-across-tiles path.
    loss_s = rmse_loss(x, y, tile_rows=8)
    jax.block_until_ready(loss_s)
    assert jnp.allclose(loss_s, _ref(x, y), rtol=1e-5, atol=1e-6), (loss_s, _ref(x, y))

    # 4) Force the split axis (2 splits) to exercise clamped-block masking.
    loss_2 = rmse_loss(xr, yr, num_splits=2)
    jax.block_until_ready(loss_2)
    assert jnp.allclose(loss_2, _ref(xr, yr), rtol=1e-5, atol=1e-6), (loss_2, _ref(xr, yr))

    # 5) Narrow dtype: bf16 inputs, streamed natively and cast in-kernel.
    xb = jax.random.normal(kx, (2, 4, 16, 16), dtype=jnp.bfloat16)
    yb = jax.random.normal(ky, (2, 4, 16, 16), dtype=jnp.bfloat16)
    loss_b = rmse_loss(xb, yb)
    jax.block_until_ready(loss_b)
    assert jnp.allclose(loss_b, _ref(xb, yb), rtol=1e-5, atol=1e-6), (loss_b, _ref(xb, yb))

    print("KERNEL_OK")
</pallas_src>

<mosaic_0001>
module attributes {stable_mosaic.version = 11 : i64} {
  func.func @_sumsq_kernel(%arg0: i32, %arg1: i32, %arg2: memref<16x128xf32, #tpu.memory_space<vmem>>, %arg3: memref<16x128xf32, #tpu.memory_space<vmem>>, %arg4: memref<1x8x128xf32, #tpu.memory_space<vmem>>) attributes {dimension_semantics = [#tpu.dimension_semantics<arbitrary>, #tpu.dimension_semantics<arbitrary>], iteration_bounds = array<i64: 1, 1>, scalar_prefetch = 0 : i64, scratch_operands = 0 : i64, tpu.core_type = #tpu.core_type<tc>, window_params = [{transform_indices = @transform_0, window_bounds = array<i64: 16, 128>}, {transform_indices = @transform_1, window_bounds = array<i64: 16, 128>}, {transform_indices = @transform_2, window_bounds = array<i64: 1, 8, 128>}]} {
    %c0_i32 = arith.constant 0 : i32
    %0 = arith.cmpi eq, %arg1, %c0_i32 : i32
    %1 = arith.extui %0 : i1 to i32
    %c0_i32_0 = arith.constant 0 : i32
    %2 = arith.cmpi ne, %1, %c0_i32_0 : i32
    scf.if %2 {
      %cst_10 = arith.constant 0.000000e+00 : f32
      %13 = vector.broadcast %cst_10 : f32 to vector<1x8x128xf32>
      %c0_11 = arith.constant 0 : index
      %c0_12 = arith.constant 0 : index
      %c0_13 = arith.constant 0 : index
      %14 = vector.load %arg4[%c0_11, %c0_12, %c0_13] : memref<1x8x128xf32, #tpu.memory_space<vmem>>, vector<1x8x128xf32>
      tpu.vector_store %arg4[%c0_11, %c0_12, %c0_13], %13 {strides = array<i32>} : memref<1x8x128xf32, #tpu.memory_space<vmem>>, vector<1x8x128xf32>,
    } else {
    }
    %c0 = arith.constant 0 : index
    %c0_1 = arith.constant 0 : index
    %3 = vector.load %arg2[%c0, %c0_1] : memref<16x128xf32, #tpu.memory_space<vmem>>, vector<16x128xf32>
    %c0_2 = arith.constant 0 : index
    %c0_3 = arith.constant 0 : index
    %4 = vector.load %arg3[%c0_2, %c0_3] : memref<16x128xf32, #tpu.memory_space<vmem>>, vector<16x128xf32>
    %5 = arith.subf %3, %4 : vector<16x128xf32>
    %6 = arith.mulf %5, %5 : vector<16x128xf32>
    %7 = vector.shape_cast %6 : vector<16x128xf32> to vector<2x8x128xf32>
    %cst = arith.constant dense<0.000000e+00> : vector<8x128xf32>
    %8 = vector.multi_reduction <add>, %7, %cst [0] : vector<2x8x128xf32> to vector<8x128xf32>
    %c0_4 = arith.constant 0 : index
    %c0_5 = arith.constant 0 : index
    %c0_6 = arith.constant 0 : index
    %9 = vector.load %arg4[%c0_4, %c0_5, %c0_6] : memref<1x8x128xf32, #tpu.memory_space<vmem>>, vector<1x8x128xf32>
    %10 = vector.shape_cast %8 : vector<8x128xf32> to vector<1x8x128xf32>
    %11 = arith.addf %9, %10 : vector<1x8x128xf32>
    %c0_7 = arith.constant 0 : index
    %c0_8 = arith.constant 0 : index
    %c0_9 = arith.constant 0 : index
    %12 = vector.load %arg4[%c0_7, %c0_8, %c0_9] : memref<1x8x128xf32, #tpu.memory_space<vmem>>, vector<1x8x128xf32>
    tpu.vector_store %arg4[%c0_7, %c0_8, %c0_9], %11 {strides = array<i32>} : memref<1x8x128xf32, #tpu.memory_space<vmem>>, vector<1x8x128xf32>,
    return
  }
  func.func @transform_0(%arg0: i32, %arg1: i32) -> (i32, i32) {
    %c1_i32 = arith.constant 1 : i32
    %0 = arith.muli %arg0, %c1_i32 : i32
    %1 = arith.addi %0, %arg1 : i32
    %c0_i32 = arith.constant 0 : i32
    %2 = arith.minsi %1, %c0_i32 : i32
    %c0_i32_0 = arith.constant 0 : i32
    %c0_i32_1 = arith.constant 0 : i32
    return %2, %c0_i32_0 : i32, i32
  }
  func.func @transform_1(%arg0: i32, %arg1: i32) -> (i32, i32) {
    %c1_i32 = arith.constant 1 : i32
    %0 = arith.muli %arg0, %c1_i32 : i32
    %1 = arith.addi %0, %arg1 : i32
    %c0_i32 = arith.constant 0 : i32
    %2 = arith.minsi %1, %c0_i32 : i32
    %c0_i32_0 = arith.constant 0 : i32
    %c0_i32_1 = arith.constant 0 : i32
    return %2, %c0_i32_0 : i32, i32
  }
  func.func @transform_2(%arg0: i32, %arg1: i32) -> (i32, i32, i32) {
    %c0_i32 = arith.constant 0 : i32
    %c0_i32_0 = arith.constant 0 : i32
    %c0_i32_1 = arith.constant 0 : i32
    return %arg0, %c0_i32, %c0_i32_0 : i32, i32, i32
  }
}

</mosaic_0001>

<llo_original>
// kernel: tpu_custom_call.1
$region0: #{tpu_custom_call.1}
  #allocation0 [shape = 'u32[]', space=smem, size = 0x4, offset = 0x4, fixed_abs, tag = 'smem constant byte address 0x4 - core index']
  #allocation1 [shape = 'u32[144,128]{1,0:T(1,128)}', space=vmem, size = 0x12000, scoped, tag = 'internal scratch']
  %s0 = inlined_call_operand.hbm [shape: f32[16,128], index: 0, kind: input, shape index: {}]
  %s1 = inlined_call_operand.hbm [shape: f32[16,128], index: 1, kind: input, shape index: {}]
  %s2 = inlined_call_operand.hbm [shape: f32[1,8,128], index: 2, kind: output, shape index: {}]
  %s3 = sld [smem:[#allocation0]]
  $region30: #{tpu_custom_call.1} parent=0
    _
  %s5 = ssub.s32 1, %s3
  %s6 = scalar_select 0, %s5, %s3
  $region1: #{tpu_custom_call.1} parent=0
    #allocation2 [shape = 'u8[8192]{0}', space=vmem, size = 0x2000, scoped, tag = 'input window, operand 0, single buffered']
    #allocation3 [shape = 's32[1]{0}', space=sflag, size = 0x4, scoped, tag = 'scoped memory for tpu_custom_call.1']
    #allocation4 [shape = 's32[1]{0}', space=sflag, size = 0x4, scoped, tag = 'scoped memory for tpu_custom_call.1']
    #allocation5 [shape = 'u8[8192]{0}', space=vmem, size = 0x2000, scoped, tag = 'input window, operand 1, single buffered']
    #allocation6 [shape = 's32[1]{0}', space=sflag, size = 0x4, scoped, tag = 'scoped memory for tpu_custom_call.1']
    #allocation7 [shape = 'u8[4096]{0}', space=vmem, size = 0x1000, scoped, tag = 'output window, operand 0, single buffered']
    %7 = vsyncpa [#allocation3], 0
    %8 = vsyncpa [#allocation6], 0
    %9 = vsyncpa [#allocation4], 0
    // Predicated region
    $region2: #{tpu_custom_call.1} parent=1 // pred_check
      _
    $region3: #{tpu_custom_call.1} parent=1 // pred_check_branch
      %11 = sbr.rel (0) target = $region5
    $region4: #{tpu_custom_call.1} parent=1 // pred_region
      %s12 = sadd.s32 0, 0
      %p13 = scmp.lt.s32.totalorder %s12, 0
      %s14 = scalar_select %p13, %s12, 0
      %s15 = smul.u32 2, %s14
      %s17 = ssub.s32 256, 256
      %18 = vsyncadd [#allocation3], %s17
      %s19 = smul.addr %s15, 128
      %s20 = scalar_lea.hbm %s0, %s19
      %s21 = sshll.u32 [#allocation2], 4
      %s22 = int_to_ptr.vmem [resolvable:$true] %s21
      %27 = dma.hbm_to_vmem [thread:$0]  %s20, 256, %s22, [#allocation3], 128, 128, 8
    $region5: #{tpu_custom_call.1} parent=1 // pred_fallthru
      _
    // Predicated region
    $region6: #{tpu_custom_call.1} parent=1 // pred_check
      _
    $region7: #{tpu_custom_call.1} parent=1 // pred_check_branch
      %29 = sbr.rel (0) target = $region9
    $region8: #{tpu_custom_call.1} parent=1 // pred_region
      %s30 = sadd.s32 0, 0
      %p31 = scmp.lt.s32.totalorder %s30, 0
      %s32 = scalar_select %p31, %s30, 0
      %s33 = smul.u32 2, %s32
      %s35 = ssub.s32 256, 256
      %36 = vsyncadd [#allocation6], %s35
      %s37 = smul.addr %s33, 128
      %s38 = scalar_lea.hbm %s1, %s37
      %s39 = sshll.u32 [#allocation5], 4
      %s40 = int_to_ptr.vmem [resolvable:$true] %s39
      %45 = dma.hbm_to_vmem [thread:$0]  %s38, 256, %s40, [#allocation6], 128, 128, 8
    $region9: #{tpu_custom_call.1} parent=1 // pred_fallthru
      _
    // Predicated region
    $region10: #{tpu_custom_call.1} parent=1 // pred_check
      _
    $region11: #{tpu_custom_call.1} parent=1 // pred_check_branch
      %47 = sbr.rel (0) target = $region13
    $region12: #{tpu_custom_call.1} parent=1 // pred_region
      %48 = dma.done [#allocation3], 256
    $region13: #{tpu_custom_call.1} parent=1 // pred_fallthru
      _
    // Predicated region
    $region14: #{tpu_custom_call.1} parent=1 // pred_check
      _
    $region15: #{tpu_custom_call.1} parent=1 // pred_check_branch
      %50 = sbr.rel (0) target = $region17
    $region16: #{tpu_custom_call.1} parent=1 // pred_region
      %51 = dma.done [#allocation6], 256
    $region17: #{tpu_custom_call.1} parent=1 // pred_fallthru
      _
    %s52 = sadd.s32 0, 0
    %p53 = scmp.lt.s32.totalorder %s52, 0
    %s54 = scalar_select %p53, %s52, 0
    %s55 = smul.u32 2, %s54
    %s56 = sadd.s32 0, 0
    %p57 = scmp.lt.s32.totalorder %s56, 0
    %s58 = scalar_select %p57, %s56, 0
    %s59 = smul.u32 2, %s58
    %p60 = scmp.eq.s32.totalorder 0, 0
    // Predicated region
    $region18: #{tpu_custom_call.1} parent=1 // pred_check
      %p61 = pneg %p60
    $region19: #{tpu_custom_call.1} parent=1 // pred_check_branch
      %63 = sbr.rel (%p61) target = $region21
    $region20: #{tpu_custom_call.1} parent=1 // pred_region
      %64 = vst [vmem:[#allocation7] sm:$0xff] 0.0
    $region21: #{tpu_custom_call.1} parent=1 // pred_fallthru
      _
    %v65 = vld [vmem:[#allocation2] sm:$0xff]
    %v66 = vld [vmem:[#allocation2 + $0x8] sm:$0xff]
    %v67 = vld [vmem:[#allocation5] sm:$0xff]
    %v68 = vld [vmem:[#allocation5 + $0x8] sm:$0xff]
    %v69 = vsub.f32 %v65, %v67
    %v70 = vsub.f32 %v66, %v68
    %v71 = vmul.f32 %v69, %v69
    %v72 = vmul.f32 %v70, %v70
    %v73 = vadd.f32 %v71, %v72
    %v74 = vld [vmem:[#allocation7] sm:$0xff]
    %v75 = vadd.f32 %v74, %v73
    %76 = vst [vmem:[#allocation7] sm:$0xff] %v75
    // Predicated region
    $region22: #{tpu_custom_call.1} parent=1 // pred_check
      _
    $region23: #{tpu_custom_call.1} parent=1 // pred_check_branch
      %78 = sbr.rel (0) target = $region25
    $region24: #{tpu_custom_call.1} parent=1 // pred_region
      %s80 = ssub.s32 128, 128
      %81 = vsyncadd [#allocation4], %s80
      %s83 = sshll.u32 [#allocation7], 4
      %s84 = int_to_ptr.vmem [resolvable:$true] %s83
      %86 = dma.vmem_to_hbm [thread:$0]  %s84, 128, %s2, [#allocation4]
    $region25: #{tpu_custom_call.1} parent=1 // pred_fallthru
      _
    // Predicated region
    $region26: #{tpu_custom_call.1} parent=1 // pred_check
      _
    $region27: #{tpu_custom_call.1} parent=1 // pred_check_branch
      %88 = sbr.rel (0) target = $region29
    $region28: #{tpu_custom_call.1} parent=1 // pred_region
      %89 = dma.done [#allocation4], 128
    $region29: #{tpu_custom_call.1} parent=1 // pred_fallthru
      _
    %90 = vsyncpa [#allocation3], 1
    %91 = vsyncpa [#allocation6], 1
    %92 = vsyncpa [#allocation4], 1

</llo_original>
